<compile_context>
chip_gen: v6e
topology: v6e:2x2x1
jax: 0.10.0
libtpu: 0.0.40
codegen_flags: <defaults>
</compile_context>

<pallas_src>
import functools

import jax
import jax.numpy as jnp
from jax.experimental import pallas as pl
from jax.experimental.pallas import tpu as pltpu


# ----------------------------------------------------------------------------
# Pallas kernel: one (batch-tile, channel-tile) block
#   q_ref/k_ref/v_ref : (Bt, n, P, dt)   out_ref : (Bt, n, P, dt)
#   attn_ref          : (Bt, n, n, dt)
# D (lane axis) is fully vectorized; all math is VPU/EUP work, no MXU.
# ----------------------------------------------------------------------------
def _period_attention_kernel(q_ref, k_ref, v_ref, out_ref, attn_ref, *, scale, n):
    q = q_ref[...].astype(jnp.float32)          # (Bt, n, P, dt)
    k = k_ref[...].astype(jnp.float32)
    v = v_ref[...].astype(jnp.float32)

    # scores[:, i, j, :] = scale * sum_p q[:, i, p, :] * k[:, j, p, :]
    # Statically unrolled over the tiny j axis so no (n, n, P, dt) temp is ever live.
    cols = []
    for j in range(n):
        kj = k[:, j:j + 1, :, :]                            # (Bt, 1, P, dt)
        cols.append(jnp.sum(q * kj, axis=2) * scale)        # (Bt, n, dt)
    scores = jnp.stack(cols, axis=2)                        # (Bt, n, n, dt)

    # numerically-stable softmax over j; exact division (attn is user-visible)
    m = jnp.max(scores, axis=2, keepdims=True)
    e = jnp.exp(scores - m)
    attn = e / jnp.sum(e, axis=2, keepdims=True)            # (Bt, n, n, dt) f32

    # out[:, i, p, :] = sum_j attn[:, i, j, :] * v[:, j, p, :]   (unrolled over j)
    out = attn[:, :, 0, None, :] * v[:, 0:1, :, :]
    for j in range(1, n):
        out = out + attn[:, :, j, None, :] * v[:, j:j + 1, :, :]

    out_ref[...] = out.astype(out_ref.dtype)
    attn_ref[...] = attn.astype(attn_ref.dtype)


# ----------------------------------------------------------------------------
# VMEM budgeting / tile selection
# ----------------------------------------------------------------------------
def _vmem_limits():
    """(vmem_limit_bytes, per-step budget) derived from physical VMEM."""
    try:
        cap = int(pltpu.get_tpu_info().vmem_capacity_bytes)
    except Exception:  # interpret mode / older runtimes: assume the smallest (v7x)
        cap = 64 * 1024 * 1024
    limit = min(96 * 1024 * 1024, (3 * cap) // 4)   # 48 MiB on v7x, 96 MiB on v5e/v6e
    budget = (3 * limit) // 4                        # headroom for compiler scratch
    return limit, budget


def _block_bytes(bt, n, P, dt, in_item, out_item):
    """Per-step VMEM footprint: double-buffered DMA blocks + f32 working set."""
    npd = bt * n * P * dt
    nnd = bt * n * n * dt
    blocks = 2 * (3 * npd * in_item + npd * out_item + nnd * 4)
    work = 5 * npd * 4 + 4 * nnd * 4   # f32 q,k,v + out acc + one product; scores/e/attn/max
    return blocks + work


def _divisors_desc(x, multiple_of=1):
    return [d for d in range(x, 0, -1) if x % d == 0 and d % multiple_of == 0]


def _pick_tiles(B, D, n, P, in_item, out_item, budget):
    # --- channel tile: largest lane-aligned divisor of D that fits the budget ---
    if D % 128 != 0:
        cands = [D]                                  # small/unaligned D: whole axis
    else:
        cands = _divisors_desc(D, multiple_of=128)   # includes D itself
    fitting = [c for c in cands if _block_bytes(1, n, P, c, in_item, out_item) <= budget]
    if not fitting:
        fitting = [cands[-1]]
    dt = fitting[0]
    if B == 1:
        # keep >= 2 grid steps so both v7x TensorCores get work
        split = [c for c in fitting if D // c >= 2]
        if split:
            dt = split[0]

    # --- batch tile: fuse batch rows when the per-step block is tiny ------------
    bt = 1
    if B > 1 and n * P * dt * in_item < 512 * 1024:
        for cand in _divisors_desc(B):
            if cand == 1:
                break
            if (B // cand) * (D // dt) < 2:          # keep >= 2 grid steps
                continue
            if _block_bytes(cand, n, P, dt, in_item, out_item) <= min(budget, 8 * 1024 * 1024):
                bt = cand
                break
    return bt, dt


# ----------------------------------------------------------------------------
# Wrapper (padding / folding glue in plain JAX; all reshapes are contiguous)
# ----------------------------------------------------------------------------
def period_attention(q, k, v, *, period=None, scale=0.45, padding=True):
    """Forward pass of PeriodAttention.  Returns (out[B, L, D], attn[B, D, n, n])."""
    if scale == 0:
        # TODO(synk): scale == 0 branch references an undefined self.act in the
        # reference module (it would crash in PyTorch too) — not implemented.
        raise NotImplementedError("scale == 0 branch is undefined in the reference")

    B, L, E = q.shape
    _, S, D = v.shape
    assert E == D, "PeriodAttention assumes E == D (the reference reshapes q with D)"

    # Match k/v length to L (reference semantics); pads in the input dtype.
    if L > S:
        v = jnp.concatenate([v, jnp.zeros((B, L - S, D), v.dtype)], axis=1)
        k = jnp.concatenate([k, jnp.zeros((B, L - S, D), k.dtype)], axis=1)
    elif L < S:
        v = v[:, :L, :]
        k = k[:, :L, :]

    if period is None:
        period = L // 4

    if L % period != 0:
        if padding:
            pad = period - L % period
            q = jnp.concatenate([q, jnp.zeros((B, pad, E), q.dtype)], axis=1)
            k = jnp.concatenate([k, jnp.zeros((B, pad, D), k.dtype)], axis=1)
            v = jnp.concatenate([v, jnp.zeros((B, pad, D), v.dtype)], axis=1)
        else:
            # TODO(synk): padding=False truncation branch of the reference is
            # self-inconsistent in the original code — not implemented.
            raise NotImplementedError("padding=False branch not implemented")

    Lp = q.shape[1]
    n = Lp // period
    P = period

    # Channel-last fold (B, Lp, D) -> (B, n, P, D): free reshape, D on lanes.
    q_cl = q.reshape(B, n, P, D)
    k_cl = k.reshape(B, n, P, D)
    v_cl = v.reshape(B, n, P, D)

    out_dtype = jnp.result_type(q.dtype, k.dtype, v.dtype)
    in_item = jnp.dtype(q.dtype).itemsize
    out_item = jnp.dtype(out_dtype).itemsize

    vmem_limit, budget = _vmem_limits()
    Bt, dt = _pick_tiles(B, D, n, P, in_item, out_item, budget)

    kernel = functools.partial(_period_attention_kernel, scale=float(scale), n=n)

    out_cl, attn_cl = pl.pallas_call(
        kernel,
        out_shape=(
            jax.ShapeDtypeStruct((B, n, P, D), out_dtype),
            jax.ShapeDtypeStruct((B, n, n, D), jnp.float32),
        ),
        grid_spec=pltpu.PrefetchScalarGridSpec(
            num_scalar_prefetch=0,
            grid=(B // Bt, D // dt),
            in_specs=[
                pl.BlockSpec((Bt, n, P, dt), lambda b, c: (b, 0, 0, c)),
                pl.BlockSpec((Bt, n, P, dt), lambda b, c: (b, 0, 0, c)),
                pl.BlockSpec((Bt, n, P, dt), lambda b, c: (b, 0, 0, c)),
            ],
            out_specs=[
                pl.BlockSpec((Bt, n, P, dt), lambda b, c: (b, 0, 0, c)),
                pl.BlockSpec((Bt, n, n, dt), lambda b, c: (b, 0, 0, c)),
            ],
        ),
        compiler_params=pltpu.CompilerParams(
            dimension_semantics=("parallel", "parallel"),
            vmem_limit_bytes=vmem_limit,
        ),
    )(q_cl, k_cl, v_cl)

    # (B, n, P, D) -> (B, Lp, D): free reshape; slice back to L.
    out = out_cl.reshape(B, Lp, D)[:, :L, :]

    # attn: lane-dense (B, n, n, D) -> reference layout (B, D, n, n).
    attn = jnp.transpose(attn_cl, (0, 3, 1, 2))
    return out, attn


# ----------------------------------------------------------------------------
# Pure-JAX reference (mirrors the PyTorch forward) for verification
# ----------------------------------------------------------------------------
def _reference(q, k, v, period=None, scale=0.45):
    B, L, E = q.shape
    _, S, D = v.shape
    q = q.astype(jnp.float32)
    k = k.astype(jnp.float32)
    v = v.astype(jnp.float32)
    if L > S:
        z = jnp.zeros((B, L - S, D), jnp.float32)
        v = jnp.concatenate([v, z], axis=1)
        k = jnp.concatenate([k, z], axis=1)
    elif L < S:
        v = v[:, :L, :]
        k = k[:, :L, :]
    if period is None:
        period = L // 4
    if L % period != 0:
        zq = jnp.zeros((B, period - L % period, E), jnp.float32)
        z = jnp.zeros((B, period - L % period, D), jnp.float32)
        q = jnp.concatenate([q, zq], axis=1)
        k = jnp.concatenate([k, z], axis=1)
        v = jnp.concatenate([v, z], axis=1)
    qp = jnp.transpose(q, (0, 2, 1)).reshape(B, D, -1, period)
    kp = jnp.transpose(k, (0, 2, 1)).reshape(B, D, -1, period)
    vp = jnp.transpose(v, (0, 2, 1)).reshape(B, D, -1, period)
    hp = jax.lax.Precision.HIGHEST
    attn = jax.nn.softmax(
        jnp.einsum("bdip,bdjp->bdij", qp, kp, precision=hp) * scale, axis=-1)
    out = jnp.einsum("bdij,bdjp->bdip", attn, vp, precision=hp)
    out = jnp.transpose(out.reshape(B, D, -1), (0, 2, 1))[:, :L, :]
    return out, attn


if __name__ == "__main__":
    TOL = dict(atol=1e-4, rtol=1e-4)

    def check(q, kk, v, period):
        out, attn = jax.block_until_ready(period_attention(q, kk, v, period=period))
        out_r, attn_r = _reference(q, kk, v, period=period)
        assert out.shape == out_r.shape, (out.shape, out_r.shape)
        assert attn.shape == attn_r.shape, (attn.shape, attn_r.shape)
        assert jnp.allclose(out, out_r, **TOL)
        assert jnp.allclose(attn, attn_r, **TOL)

    # Case 1: lane-unaligned small D (dt == D) with batch fusion (Bt = 2).
    k1, k2, k3 = jax.random.split(jax.random.PRNGKey(0), 3)
    B, L, S, D = 4, 16, 16, 8
    q = jax.random.normal(k1, (B, L, D), dtype=jnp.float32)
    kk = jax.random.normal(k2, (B, S, D), dtype=jnp.float32)
    v = jax.random.normal(k3, (B, S, D), dtype=jnp.float32)
    check(q, kk, v, period=None)   # period = L // 4

    # Case 2: lane-aligned channels, L > S (k/v zero-extension), L % period != 0
    #         (tail padding), uneven period P = 7.
    k4, k5, k6 = jax.random.split(jax.random.PRNGKey(1), 3)
    B, L, S, D, per = 2, 24, 20, 1024, 7
    q = jax.random.normal(k4, (B, L, D), dtype=jnp.float32)
    kk = jax.random.normal(k5, (B, S, D), dtype=jnp.float32)
    v = jax.random.normal(k6, (B, S, D), dtype=jnp.float32)
    check(q, kk, v, period=per)

    # Case 3: B == 1 — channel axis is split so the grid has >= 2 steps.
    k7, k8, k9 = jax.random.split(jax.random.PRNGKey(2), 3)
    B, L, S, D = 1, 16, 16, 256
    q = jax.random.normal(k7, (B, L, D), dtype=jnp.float32)
    kk = jax.random.normal(k8, (B, S, D), dtype=jnp.float32)
    v = jax.random.normal(k9, (B, S, D), dtype=jnp.float32)
    check(q, kk, v, period=None)

    print("KERNEL_OK")
</pallas_src>

<mosaic_0001>
module attributes {stable_mosaic.version = 11 : i64} {
  func.func @_period_attention_kernel(%arg0: i32, %arg1: i32, %arg2: memref<2x4x4x8xf32, #tpu.memory_space<vmem>>, %arg3: memref<2x4x4x8xf32, #tpu.memory_space<vmem>>, %arg4: memref<2x4x4x8xf32, #tpu.memory_space<vmem>>, %arg5: memref<2x4x4x8xf32, #tpu.memory_space<vmem>>, %arg6: memref<2x4x4x8xf32, #tpu.memory_space<vmem>>) attributes {dimension_semantics = [#tpu.dimension_semantics<parallel>, #tpu.dimension_semantics<parallel>], iteration_bounds = array<i64: 2, 1>, scalar_prefetch = 0 : i64, scratch_operands = 0 : i64, tpu.core_type = #tpu.core_type<tc>, window_params = [{transform_indices = @transform_0, window_bounds = array<i64: 2, 4, 4, 8>}, {transform_indices = @transform_1, window_bounds = array<i64: 2, 4, 4, 8>}, {transform_indices = @transform_2, window_bounds = array<i64: 2, 4, 4, 8>}, {transform_indices = @transform_3, window_bounds = array<i64: 2, 4, 4, 8>}, {transform_indices = @transform_4, window_bounds = array<i64: 2, 4, 4, 8>}]} {
    %c0 = arith.constant 0 : index
    %c0_0 = arith.constant 0 : index
    %c0_1 = arith.constant 0 : index
    %c0_2 = arith.constant 0 : index
    %0 = vector.load %arg2[%c0, %c0_0, %c0_1, %c0_2] : memref<2x4x4x8xf32, #tpu.memory_space<vmem>>, vector<2x4x4x8xf32>
    %c0_3 = arith.constant 0 : index
    %c0_4 = arith.constant 0 : index
    %c0_5 = arith.constant 0 : index
    %c0_6 = arith.constant 0 : index
    %1 = vector.load %arg3[%c0_3, %c0_4, %c0_5, %c0_6] : memref<2x4x4x8xf32, #tpu.memory_space<vmem>>, vector<2x4x4x8xf32>
    %c0_7 = arith.constant 0 : index
    %c0_8 = arith.constant 0 : index
    %c0_9 = arith.constant 0 : index
    %c0_10 = arith.constant 0 : index
    %2 = vector.load %arg4[%c0_7, %c0_8, %c0_9, %c0_10] : memref<2x4x4x8xf32, #tpu.memory_space<vmem>>, vector<2x4x4x8xf32>
    %3 = vector.extract_strided_slice %1 {offsets = [0, 0, 0, 0], sizes = [2, 1, 4, 8], strides = [1, 1, 1, 1]} : vector<2x4x4x8xf32> to vector<2x1x4x8xf32>
    %4 = vector.broadcast %3 : vector<2x1x4x8xf32> to vector<2x4x4x8xf32>
    %5 = arith.mulf %0, %4 : vector<2x4x4x8xf32>
    %cst = arith.constant dense<0.000000e+00> : vector<2x4x8xf32>
    %6 = vector.multi_reduction <add>, %5, %cst [2] : vector<2x4x4x8xf32> to vector<2x4x8xf32>
    %cst_11 = arith.constant 4.500000e-01 : f32
    %7 = vector.broadcast %cst_11 : f32 to vector<2x4x8xf32>
    %8 = arith.mulf %6, %7 : vector<2x4x8xf32>
    %9 = vector.extract_strided_slice %1 {offsets = [0, 1, 0, 0], sizes = [2, 1, 4, 8], strides = [1, 1, 1, 1]} : vector<2x4x4x8xf32> to vector<2x1x4x8xf32>
    %10 = vector.broadcast %9 : vector<2x1x4x8xf32> to vector<2x4x4x8xf32>
    %11 = arith.mulf %0, %10 : vector<2x4x4x8xf32>
    %cst_12 = arith.constant dense<0.000000e+00> : vector<2x4x8xf32>
    %12 = vector.multi_reduction <add>, %11, %cst_12 [2] : vector<2x4x4x8xf32> to vector<2x4x8xf32>
    %cst_13 = arith.constant 4.500000e-01 : f32
    %13 = vector.broadcast %cst_13 : f32 to vector<2x4x8xf32>
    %14 = arith.mulf %12, %13 : vector<2x4x8xf32>
    %15 = vector.extract_strided_slice %1 {offsets = [0, 2, 0, 0], sizes = [2, 1, 4, 8], strides = [1, 1, 1, 1]} : vector<2x4x4x8xf32> to vector<2x1x4x8xf32>
    %16 = vector.broadcast %15 : vector<2x1x4x8xf32> to vector<2x4x4x8xf32>
    %17 = arith.mulf %0, %16 : vector<2x4x4x8xf32>
    %cst_14 = arith.constant dense<0.000000e+00> : vector<2x4x8xf32>
    %18 = vector.multi_reduction <add>, %17, %cst_14 [2] : vector<2x4x4x8xf32> to vector<2x4x8xf32>
    %cst_15 = arith.constant 4.500000e-01 : f32
    %19 = vector.broadcast %cst_15 : f32 to vector<2x4x8xf32>
    %20 = arith.mulf %18, %19 : vector<2x4x8xf32>
    %21 = vector.extract_strided_slice %1 {offsets = [0, 3, 0, 0], sizes = [2, 1, 4, 8], strides = [1, 1, 1, 1]} : vector<2x4x4x8xf32> to vector<2x1x4x8xf32>
    %22 = vector.broadcast %21 : vector<2x1x4x8xf32> to vector<2x4x4x8xf32>
    %23 = arith.mulf %0, %22 : vector<2x4x4x8xf32>
    %cst_16 = arith.constant dense<0.000000e+00> : vector<2x4x8xf32>
    %24 = vector.multi_reduction <add>, %23, %cst_16 [2] : vector<2x4x4x8xf32> to vector<2x4x8xf32>
    %cst_17 = arith.constant 4.500000e-01 : f32
    %25 = vector.broadcast %cst_17 : f32 to vector<2x4x8xf32>
    %26 = arith.mulf %24, %25 : vector<2x4x8xf32>
    %27 = vector.shape_cast %8 : vector<2x4x8xf32> to vector<2x4x1x8xf32>
    %28 = vector.shape_cast %14 : vector<2x4x8xf32> to vector<2x4x1x8xf32>
    %29 = vector.shape_cast %20 : vector<2x4x8xf32> to vector<2x4x1x8xf32>
    %30 = vector.shape_cast %26 : vector<2x4x8xf32> to vector<2x4x1x8xf32>
    %31 = tpu.concatenate %27, %28, %29, %30 in 2 : vector<2x4x1x8xf32>, vector<2x4x1x8xf32>, vector<2x4x1x8xf32>, vector<2x4x1x8xf32> -> vector<2x4x4x8xf32>
    %cst_18 = arith.constant dense<0xFF800000> : vector<2x4x8xf32>
    %32 = vector.multi_reduction <maximumf>, %31, %cst_18 [2] : vector<2x4x4x8xf32> to vector<2x4x8xf32>
    %33 = vector.shape_cast %32 : vector<2x4x8xf32> to vector<2x4x1x8xf32>
    %34 = vector.broadcast %33 : vector<2x4x1x8xf32> to vector<2x4x4x8xf32>
    %35 = arith.subf %31, %34 : vector<2x4x4x8xf32>
    %36 = math.exp %35 : vector<2x4x4x8xf32>
    %cst_19 = arith.constant dense<0.000000e+00> : vector<2x4x8xf32>
    %37 = vector.multi_reduction <add>, %36, %cst_19 [2] : vector<2x4x4x8xf32> to vector<2x4x8xf32>
    %38 = vector.shape_cast %37 : vector<2x4x8xf32> to vector<2x4x1x8xf32>
    %39 = vector.broadcast %38 : vector<2x4x1x8xf32> to vector<2x4x4x8xf32>
    %40 = arith.divf %36, %39 : vector<2x4x4x8xf32>
    %41 = vector.extract_strided_slice %40 {offsets = [0, 0, 0, 0], sizes = [2, 4, 1, 8], strides = [1, 1, 1, 1]} : vector<2x4x4x8xf32> to vector<2x4x1x8xf32>
    %42 = vector.shape_cast %41 : vector<2x4x1x8xf32> to vector<2x4x8xf32>
    %43 = vector.shape_cast %42 : vector<2x4x8xf32> to vector<2x4x1x8xf32>
    %44 = vector.extract_strided_slice %2 {offsets = [0, 0, 0, 0], sizes = [2, 1, 4, 8], strides = [1, 1, 1, 1]} : vector<2x4x4x8xf32> to vector<2x1x4x8xf32>
    %45 = vector.broadcast %43 : vector<2x4x1x8xf32> to vector<2x4x4x8xf32>
    %46 = vector.broadcast %44 : vector<2x1x4x8xf32> to vector<2x4x4x8xf32>
    %47 = arith.mulf %45, %46 : vector<2x4x4x8xf32>
    %48 = vector.extract_strided_slice %40 {offsets = [0, 0, 1, 0], sizes = [2, 4, 1, 8], strides = [1, 1, 1, 1]} : vector<2x4x4x8xf32> to vector<2x4x1x8xf32>
    %49 = vector.shape_cast %48 : vector<2x4x1x8xf32> to vector<2x4x8xf32>
    %50 = vector.shape_cast %49 : vector<2x4x8xf32> to vector<2x4x1x8xf32>
    %51 = vector.extract_strided_slice %2 {offsets = [0, 1, 0, 0], sizes = [2, 1, 4, 8], strides = [1, 1, 1, 1]} : vector<2x4x4x8xf32> to vector<2x1x4x8xf32>
    %52 = vector.broadcast %50 : vector<2x4x1x8xf32> to vector<2x4x4x8xf32>
    %53 = vector.broadcast %51 : vector<2x1x4x8xf32> to vector<2x4x4x8xf32>
    %54 = arith.mulf %52, %53 : vector<2x4x4x8xf32>
    %55 = arith.addf %47, %54 : vector<2x4x4x8xf32>
    %56 = vector.extract_strided_slice %40 {offsets = [0, 0, 2, 0], sizes = [2, 4, 1, 8], strides = [1, 1, 1, 1]} : vector<2x4x4x8xf32> to vector<2x4x1x8xf32>
    %57 = vector.shape_cast %56 : vector<2x4x1x8xf32> to vector<2x4x8xf32>
    %58 = vector.shape_cast %57 : vector<2x4x8xf32> to vector<2x4x1x8xf32>
    %59 = vector.extract_strided_slice %2 {offsets = [0, 2, 0, 0], sizes = [2, 1, 4, 8], strides = [1, 1, 1, 1]} : vector<2x4x4x8xf32> to vector<2x1x4x8xf32>
    %60 = vector.broadcast %58 : vector<2x4x1x8xf32> to vector<2x4x4x8xf32>
    %61 = vector.broadcast %59 : vector<2x1x4x8xf32> to vector<2x4x4x8xf32>
    %62 = arith.mulf %60, %61 : vector<2x4x4x8xf32>
    %63 = arith.addf %55, %62 : vector<2x4x4x8xf32>
    %64 = vector.extract_strided_slice %40 {offsets = [0, 0, 3, 0], sizes = [2, 4, 1, 8], strides = [1, 1, 1, 1]} : vector<2x4x4x8xf32> to vector<2x4x1x8xf32>
    %65 = vector.shape_cast %64 : vector<2x4x1x8xf32> to vector<2x4x8xf32>
    %66 = vector.shape_cast %65 : vector<2x4x8xf32> to vector<2x4x1x8xf32>
    %67 = vector.extract_strided_slice %2 {offsets = [0, 3, 0, 0], sizes = [2, 1, 4, 8], strides = [1, 1, 1, 1]} : vector<2x4x4x8xf32> to vector<2x1x4x8xf32>
    %68 = vector.broadcast %66 : vector<2x4x1x8xf32> to vector<2x4x4x8xf32>
    %69 = vector.broadcast %67 : vector<2x1x4x8xf32> to vector<2x4x4x8xf32>
    %70 = arith.mulf %68, %69 : vector<2x4x4x8xf32>
    %71 = arith.addf %63, %70 : vector<2x4x4x8xf32>
    %c0_20 = arith.constant 0 : index
    %c0_21 = arith.constant 0 : index
    %c0_22 = arith.constant 0 : index
    %c0_23 = arith.constant 0 : index
    %72 = vector.load %arg5[%c0_20, %c0_21, %c0_22, %c0_23] : memref<2x4x4x8xf32, #tpu.memory_space<vmem>>, vector<2x4x4x8xf32>
    tpu.vector_store %arg5[%c0_20, %c0_21, %c0_22, %c0_23], %71 {strides = array<i32>} : memref<2x4x4x8xf32, #tpu.memory_space<vmem>>, vector<2x4x4x8xf32>,
    %c0_24 = arith.constant 0 : index
    %c0_25 = arith.constant 0 : index
    %c0_26 = arith.constant 0 : index
    %c0_27 = arith.constant 0 : index
    %73 = vector.load %arg6[%c0_24, %c0_25, %c0_26, %c0_27] : memref<2x4x4x8xf32, #tpu.memory_space<vmem>>, vector<2x4x4x8xf32>
    tpu.vector_store %arg6[%c0_24, %c0_25, %c0_26, %c0_27], %40 {strides = array<i32>} : memref<2x4x4x8xf32, #tpu.memory_space<vmem>>, vector<2x4x4x8xf32>,
    return
  }
  func.func @transform_0(%arg0: i32, %arg1: i32) -> (i32, i32, i32, i32) {
    %c0_i32 = arith.constant 0 : i32
    %c0_i32_0 = arith.constant 0 : i32
    %c0_i32_1 = arith.constant 0 : i32
    return %arg0, %c0_i32, %c0_i32_0, %arg1 : i32, i32, i32, i32
  }
  func.func @transform_1(%arg0: i32, %arg1: i32) -> (i32, i32, i32, i32) {
    %c0_i32 = arith.constant 0 : i32
    %c0_i32_0 = arith.constant 0 : i32
    %c0_i32_1 = arith.constant 0 : i32
    return %arg0, %c0_i32, %c0_i32_0, %arg1 : i32, i32, i32, i32
  }
  func.func @transform_2(%arg0: i32, %arg1: i32) -> (i32, i32, i32, i32) {
    %c0_i32 = arith.constant 0 : i32
    %c0_i32_0 = arith.constant 0 : i32
    %c0_i32_1 = arith.constant 0 : i32
    return %arg0, %c0_i32, %c0_i32_0, %arg1 : i32, i32, i32, i32
  }
  func.func @transform_3(%arg0: i32, %arg1: i32) -> (i32, i32, i32, i32) {
    %c0_i32 = arith.constant 0 : i32
    %c0_i32_0 = arith.constant 0 : i32
    %c0_i32_1 = arith.constant 0 : i32
    return %arg0, %c0_i32, %c0_i32_0, %arg1 : i32, i32, i32, i32
  }
  func.func @transform_4(%arg0: i32, %arg1: i32) -> (i32, i32, i32, i32) {
    %c0_i32 = arith.constant 0 : i32
    %c0_i32_0 = arith.constant 0 : i32
    %c0_i32_1 = arith.constant 0 : i32
    return %arg0, %c0_i32, %c0_i32_0, %arg1 : i32, i32, i32, i32
  }
}

</mosaic_0001>

<llo_original>
// kernel: tpu_custom_call.1
$region0: #{tpu_custom_call.1}
  #allocation0 [shape = 'u32[]', space=smem, size = 0x4, offset = 0x4, fixed_abs, tag = 'smem constant byte address 0x4 - core index']
  #allocation1 [shape = 'u32[144,128]{1,0:T(1,128)}', space=vmem, size = 0x12000, scoped, tag = 'internal scratch']
  %s0 = inlined_call_operand.hbm [shape: f32[4,4,4,8], index: 0, kind: input, shape index: {}]
  %s1 = inlined_call_operand.hbm [shape: f32[4,4,4,8], index: 1, kind: input, shape index: {}]
  %s2 = inlined_call_operand.hbm [shape: f32[4,4,4,8], index: 2, kind: input, shape index: {}]
  %s3 = inlined_call_operand.hbm [shape: f32[4,4,4,8], index: 3, kind: output, shape index: {0}]
  %s4 = inlined_call_operand.hbm [shape: f32[4,4,4,8], index: 4, kind: output, shape index: {1}]
  %5 = xla_tuple %s3, %s4
  %s6 = sld [smem:[#allocation0]]
  $region65: #{tpu_custom_call.1} parent=0
    _
  %s8 = ssub.s32 1, %s6
  %s9 = scalar_select 0, %s8, %s6
  $region1: #{tpu_custom_call.1} parent=0
    #allocation2 [shape = 'u8[32768]{0}', space=vmem, size = 0x8000, scoped, tag = 'input window, operand 0']
    #allocation3 [shape = 's32[2]{0}', space=sflag, size = 0x8, scoped, tag = 'scoped memory for tpu_custom_call.1']
    #allocation4 [shape = 's32[2]{0}', space=sflag, size = 0x8, scoped, tag = 'scoped memory for tpu_custom_call.1']
    #allocation5 [shape = 'u8[32768]{0}', space=vmem, size = 0x8000, scoped, tag = 'input window, operand 1']
    #allocation6 [shape = 's32[2]{0}', space=sflag, size = 0x8, scoped, tag = 'scoped memory for tpu_custom_call.1']
    #allocation7 [shape = 'u8[32768]{0}', space=vmem, size = 0x8000, scoped, tag = 'input window, operand 2']
    #allocation8 [shape = 'u8[32768]{0}', space=vmem, size = 0x8000, scoped, tag = 'output window, operand 0']
    #allocation9 [shape = 'u8[32768]{0}', space=vmem, size = 0x8000, scoped, tag = 'output window, operand 1']
    #allocation10 [shape = 's32[2]{0}', space=sflag, size = 0x8, scoped, tag = 'scoped memory for tpu_custom_call.1']
    %10 = vsyncpa [#allocation3], 0
    %s11 = scalar_lea.sflag [#allocation3], 1
    %12 = vsyncpa %s11, 0
    %13 = vsyncpa [#allocation6], 0
    %s14 = scalar_lea.sflag [#allocation6], 1
    %15 = vsyncpa %s14, 0
    %16 = vsyncpa [#allocation4], 0
    %s17 = scalar_lea.sflag [#allocation4], 1
    %18 = vsyncpa %s17, 0
    %19 = vsyncpa [#allocation10], 0
    %s20 = scalar_lea.sflag [#allocation10], 1
    %21 = vsyncpa %s20, 0
    loop: start=0, step=1, limit=4
    $region2: #{tpu_custom_call.1} parent=1 // loop_pre_header
      _
    $region3: #{tpu_custom_call.1} parent=1 // loop_header
      %s23 = sphi 0, %s27
      %p24 = scmp.ge.s32.totalorder %s23, 4
      %s30 = sphi 0, %s42
      %s31 = sphi 0, %s38
      %s32 = sphi 0, %s30
      %s33 = sphi 0, %s31
      %s34 = sphi 0, %s32
      %s35 = sphi 0, %s33
      %s47 = sphi 0, %s49
      %s50 = sphi 0, %s47
      %s51 = sphi 0, %s50
      %s67 = sphi 0, %s51
      %s75 = sphi 0, %s77
      %s78 = sphi 0, %s75
      %s79 = sphi 0, %s78
      %s95 = sphi 0, %s79
      %s103 = sphi 0, %s105
      %s106 = sphi 0, %s103
      %s107 = sphi 0, %s106
      %s123 = sphi 0, %s107
      %s131 = sphi 0, %s133
      %s134 = sphi 0, %s131
      %s135 = sphi 0, %s134
      %s151 = sphi 0, %s135
      %s159 = sphi 0, %s161
      %s162 = sphi 0, %s159
      %s163 = sphi 0, %s162
      %s179 = sphi 0, %s163
    $region4: #{tpu_custom_call.1} parent=1 // loop_header_branch
      %26 = sbr.rel (%p24) target = $region8
    $region5: #{tpu_custom_call.1} parent=1 // loop_body
      %s28 = ssub.s32 %s23, 1
      %s29 = ssub.s32 %s23, 2
      %s36 = sadd.s32 1, %s31
      %p37 = scmp.ge.s32.totalorder %s36, 1
      %s38 = scalar_select %p37, 0, %s36
      %s39 = sadd.s32 1, %s30
      %s40 = scalar_select %p37, %s39, %s30
      %p41 = scmp.ge.s32.totalorder %s40, 2
      %s42 = scalar_select %p41, 0, %s40
      %s43 = ssub.s32 %s30, %s42
      %s44 = ssub.s32 %s31, %s38
      %s45 = sor.u32 %s43, %s44
      %p46 = scmp.eq.s32.totalorder %s45, 0
      %s48 = sadd.s32 %s47, 1
      %s49 = scalar_select %p46, %s47, %s48
      %p52 = pneg %p46
      %p53 = scmp.eq.s32.totalorder %s23, 1
      %p54 = por %p52, %p53
      %p55 = scmp.ne.s32.totalorder %s47, %s50
      %p56 = scmp.eq.s32.totalorder %s23, 0
      %p57 = por %p55, %p56
      %p58 = scmp.ne.s32.totalorder %s47, %s50
      %p59 = scmp.eq.s32.totalorder %s28, 1
      %p60 = por %p58, %p59
      %p61 = scmp.ne.s32.totalorder %s50, %s51
      %p62 = scmp.eq.s32.totalorder %s28, 0
      %p63 = por %p61, %p62
      %p64 = scmp.ne.s32.totalorder %s50, %s51
      %p65 = scmp.eq.s32.totalorder %s29, 1
      %p66 = por %p64, %p65
      %p68 = scmp.ne.s32.totalorder %s51, %s67
      %p69 = scmp.eq.s32.totalorder %s29, 0
      %p70 = por %p68, %p69
      %s71 = ssub.s32 %s30, %s42
      %s72 = ssub.s32 %s31, %s38
      %s73 = sor.u32 %s71, %s72
      %p74 = scmp.eq.s32.totalorder %s73, 0
      %s76 = sadd.s32 %s75, 1
      %s77 = scalar_select %p74, %s75, %s76
      %p80 = pneg %p74
      %p81 = scmp.eq.s32.totalorder %s23, 1
      %p82 = por %p80, %p81
      %p83 = scmp.ne.s32.totalorder %s75, %s78
      %p84 = scmp.eq.s32.totalorder %s23, 0
      %p85 = por %p83, %p84
      %p86 = scmp.ne.s32.totalorder %s75, %s78
      %p87 = scmp.eq.s32.totalorder %s28, 1
      %p88 = por %p86, %p87
      %p89 = scmp.ne.s32.totalorder %s78, %s79
      %p90 = scmp.eq.s32.totalorder %s28, 0
      %p91 = por %p89, %p90
      %p92 = scmp.ne.s32.totalorder %s78, %s79
      %p93 = scmp.eq.s32.totalorder %s29, 1
      %p94 = por %p92, %p93
      %p96 = scmp.ne.s32.totalorder %s79, %s95
      %p97 = scmp.eq.s32.totalorder %s29, 0
      %p98 = por %p96, %p97
      %s99 = ssub.s32 %s30, %s42
      %s100 = ssub.s32 %s31, %s38
      %s101 = sor.u32 %s99, %s100
      %p102 = scmp.eq.s32.totalorder %s101, 0
      %s104 = sadd.s32 %s103, 1
      %s105 = scalar_select %p102, %s103, %s104
      %p108 = pneg %p102
      %p109 = scmp.eq.s32.totalorder %s23, 1
      %p110 = por %p108, %p109
      %p111 = scmp.ne.s32.totalorder %s103, %s106
      %p112 = scmp.eq.s32.totalorder %s23, 0
      %p113 = por %p111, %p112
      %p114 = scmp.ne.s32.totalorder %s103, %s106
      %p115 = scmp.eq.s32.totalorder %s28, 1
      %p116 = por %p114, %p115
      %p117 = scmp.ne.s32.totalorder %s106, %s107
      %p118 = scmp.eq.s32.totalorder %s28, 0
      %p119 = por %p117, %p118
      %p120 = scmp.ne.s32.totalorder %s106, %s107
      %p121 = scmp.eq.s32.totalorder %s29, 1
      %p122 = por %p120, %p121
      %p124 = scmp.ne.s32.totalorder %s107, %s123
      %p125 = scmp.eq.s32.totalorder %s29, 0
      %p126 = por %p124, %p125
      %s127 = ssub.s32 %s30, %s42
      %s128 = ssub.s32 %s31, %s38
      %s129 = sor.u32 %s127, %s128
      %p130 = scmp.eq.s32.totalorder %s129, 0
      %s132 = sadd.s32 %s131, 1
      %s133 = scalar_select %p130, %s131, %s132
      %p136 = pneg %p130
      %p137 = scmp.eq.s32.totalorder %s23, 1
      %p138 = por %p136, %p137
      %p139 = scmp.ne.s32.totalorder %s131, %s134
      %p140 = scmp.eq.s32.totalorder %s23, 0
      %p141 = por %p139, %p140
      %p142 = scmp.ne.s32.totalorder %s131, %s134
      %p143 = scmp.eq.s32.totalorder %s28, 1
      %p144 = por %p142, %p143
      %p145 = scmp.ne.s32.totalorder %s134, %s135
      %p146 = scmp.eq.s32.totalorder %s28, 0
      %p147 = por %p145, %p146
      %p148 = scmp.ne.s32.totalorder %s134, %s135
      %p149 = scmp.eq.s32.totalorder %s29, 1
      %p150 = por %p148, %p149
      %p152 = scmp.ne.s32.totalorder %s135, %s151
      %p153 = scmp.eq.s32.totalorder %s29, 0
      %p154 = por %p152, %p153
      %s155 = ssub.s32 %s30, %s42
      %s156 = ssub.s32 %s31, %s38
      %s157 = sor.u32 %s155, %s156
      %p158 = scmp.eq.s32.totalorder %s157, 0
      %s160 = sadd.s32 %s159, 1
      %s161 = scalar_select %p158, %s159, %s160
      %p164 = pneg %p158
      %p165 = scmp.eq.s32.totalorder %s23, 1
      %p166 = por %p164, %p165
      %p167 = scmp.ne.s32.totalorder %s159, %s162
      %p168 = scmp.eq.s32.totalorder %s23, 0
      %p169 = por %p167, %p168
      %p170 = scmp.ne.s32.totalorder %s159, %s162
      %p171 = scmp.eq.s32.totalorder %s28, 1
      %p172 = por %p170, %p171
      %p173 = scmp.ne.s32.totalorder %s162, %s163
      %p174 = scmp.eq.s32.totalorder %s28, 0
      %p175 = por %p173, %p174
      %p176 = scmp.ne.s32.totalorder %s162, %s163
      %p177 = scmp.eq.s32.totalorder %s29, 1
      %p178 = por %p176, %p177
      %p180 = scmp.ne.s32.totalorder %s163, %s179
      %p181 = scmp.eq.s32.totalorder %s29, 0
      %p182 = por %p180, %p181
      %p183 = scmp.le.s32.totalorder 1, %s23
      %p184 = scmp.lt.s32.totalorder %s23, 3
      %p185 = pnand %p183, %p184
      %p186 = pneg %p185
      // Predicated region
      $region9: #{tpu_custom_call.1} parent=5 // pred_check
        _
      $region10: #{tpu_custom_call.1} parent=5 // pred_check_branch
        %188 = sbr.rel (%p185) target = $region12
      $region11: #{tpu_custom_call.1} parent=5 // pred_region
        %s189 = ssub.s32 %s23, 1
      $region12: #{tpu_custom_call.1} parent=5 // pred_fallthru
        _
      %p190 = scmp.lt.s32.totalorder %s23, 2
      // Predicated region
      $region13: #{tpu_custom_call.1} parent=5 // pred_check
        %p191 = pneg %p190
      $region14: #{tpu_custom_call.1} parent=5 // pred_check_branch
        %193 = sbr.rel (%p191) target = $region16
      $region15: #{tpu_custom_call.1} parent=5 // pred_region
        // Predicated region
        $region17: #{tpu_custom_call.1} parent=15 // pred_check
          %p194 = pneg %p57
        $region18: #{tpu_custom_call.1} parent=15 // pred_check_branch
          %196 = sbr.rel (%p194) target = $region20
        $region19: #{tpu_custom_call.1} parent=15 // pred_region
          %s197 = sand.u32 %s47, 1
          %s198 = scalar_lea.sflag [#allocation3], %s197
          %s199 = sand.u32 %s47, 1
          %s200 = smul.addr %s199, 32
          %s201 = scalar_lea.vmem [#allocation2], %s200
          %s202 = smul.u32 2, %s30
          %s204 = ssub.s32 512, 512
          %205 = vsyncadd %s198, %s204
          %s206 = smul.addr %s202, 4
          %s207 = sadd.s32 %s31, %s206
          %s208 = smul.addr %s207, 64
          %s209 = scalar_lea.hbm %s0, %s208
          %s210 = sshll.u32 %s201, 4
          %s211 = int_to_ptr.vmem [resolvable:$true] %s210
          %216 = dma.hbm_to_vmem [thread:$0]  %s209, 512, %s211, %s198, 64, 64, 4
        $region20: #{tpu_custom_call.1} parent=15 // pred_fallthru
          _
        // Predicated region
        $region21: #{tpu_custom_call.1} parent=15 // pred_check
          %p217 = pneg %p85
        $region22: #{tpu_custom_call.1} parent=15 // pred_check_branch
          %219 = sbr.rel (%p217) target = $region24
        $region23: #{tpu_custom_call.1} parent=15 // pred_region
          %s220 = sand.u32 %s23, 1
          %s221 = scalar_lea.sflag [#allocation6], %s220
          %s222 = sand.u32 %s75, 1
          %s223 = smul.addr %s222, 32
          %s224 = scalar_lea.vmem [#allocation5], %s223
          %s225 = smul.u32 2, %s30
          %s227 = ssub.s32 512, 512
          %228 = vsyncadd %s221, %s227
          %s229 = smul.addr %s225, 4
          %s230 = sadd.s32 %s31, %s229
          %s231 = smul.addr %s230, 64
          %s232 = scalar_lea.hbm %s1, %s231
          %s233 = sshll.u32 %s224, 4
          %s234 = int_to_ptr.vmem [resolvable:$true] %s233
          %239 = dma.hbm_to_vmem [thread:$0]  %s232, 512, %s234, %s221, 64, 64, 4
        $region24: #{tpu_custom_call.1} parent=15 // pred_fallthru
          _
        // Predicated region
        $region25: #{tpu_custom_call.1} parent=15 // pred_check
          %p240 = pneg %p113
        $region26: #{tpu_custom_call.1} parent=15 // pred_check_branch
          %242 = sbr.rel (%p240) target = $region28
        $region27: #{tpu_custom_call.1} parent=15 // pred_region
          %s243 = sand.u32 %s23, 1
          %s244 = scalar_lea.sflag [#allocation6], %s243
          %s245 = sand.u32 %s103, 1
          %s246 = smul.addr %s245, 32
          %s247 = scalar_lea.vmem [#allocation7], %s246
          %s248 = smul.u32 2, %s30
          %s250 = ssub.s32 512, 512
          %251 = vsyncadd %s244, %s250
          %s252 = smul.addr %s248, 4
          %s253 = sadd.s32 %s31, %s252
          %s254 = smul.addr %s253, 64
          %s255 = scalar_lea.hbm %s2, %s254
          %s256 = sshll.u32 %s247, 4
          %s257 = int_to_ptr.vmem [resolvable:$true] %s256
          %262 = dma.hbm_to_vmem [thread:$0]  %s255, 512, %s257, %s244, 64, 64, 4
        $region28: #{tpu_custom_call.1} parent=15 // pred_fallthru
          _
      $region16: #{tpu_custom_call.1} parent=5 // pred_fallthru
        _
      %p263 = scmp.le.s32.totalorder 1, %s23
      %p264 = scmp.lt.s32.totalorder %s23, 3
      %p265 = pnand %p263, %p264
      %p266 = pneg %p265
      // Predicated region
      $region29: #{tpu_custom_call.1} parent=5 // pred_check
        _
      $region30: #{tpu_custom_call.1} parent=5 // pred_check_branch
        %268 = sbr.rel (%p265) target = $region32
      $region31: #{tpu_custom_call.1} parent=5 // pred_region
        %s269 = ssub.s32 %s23, 1
        %s270 = sand.u32 %s50, 1
        %s271 = scalar_lea.sflag [#allocation3], %s270
        %s272 = sand.u32 %s50, 1
        %s273 = smul.addr %s272, 32
        %s274 = scalar_lea.vmem [#allocation2], %s273
        // Predicated region
        $region33: #{tpu_custom_call.1} parent=31 // pred_check
          %p275 = pneg %p63
        $region34: #{tpu_custom_call.1} parent=31 // pred_check_branch
          %277 = sbr.rel (%p275) target = $region36
        $region35: #{tpu_custom_call.1} parent=31 // pred_region
          %278 = dma.done %s271, 512
        $region36: #{tpu_custom_call.1} parent=31 // pred_fallthru
          _
        %s279 = sand.u32 %s28, 1
        %s280 = scalar_lea.sflag [#allocation6], %s279
        %s281 = sand.u32 %s78, 1
        %s282 = smul.addr %s281, 32
        %s283 = scalar_lea.vmem [#allocation5], %s282
        // Predicated region
        $region37: #{tpu_custom_call.1} parent=31 // pred_check
          %p284 = pneg %p91
        $region38: #{tpu_custom_call.1} parent=31 // pred_check_branch
          %286 = sbr.rel (%p284) target = $region40
        $region39: #{tpu_custom_call.1} parent=31 // pred_region
          %287 = dma.done %s280, 512
        $region40: #{tpu_custom_call.1} parent=31 // pred_fallthru
          _
        %s288 = sand.u32 %s28, 1
        %s289 = scalar_lea.sflag [#allocation6], %s288
        %s290 = sand.u32 %s106, 1
        %s291 = smul.addr %s290, 32
        %s292 = scalar_lea.vmem [#allocation7], %s291
        // Predicated region
        $region41: #{tpu_custom_call.1} parent=31 // pred_check
          %p293 = pneg %p119
        $region42: #{tpu_custom_call.1} parent=31 // pred_check_branch
          %295 = sbr.rel (%p293) target = $region44
        $region43: #{tpu_custom_call.1} parent=31 // pred_region
          %296 = dma.done %s289, 512
        $region44: #{tpu_custom_call.1} parent=31 // pred_fallthru
          _
        %s297 = sand.u32 %s50, 1
        %s298 = scalar_lea.sflag [#allocation3], %s297
        %s299 = sand.u32 %s50, 1
        %s300 = smul.addr %s299, 32
        %s301 = scalar_lea.vmem [#allocation2], %s300
        %p302 = pneg %p63
        %p303 = pneg %p60
        %s304 = sand.u32 %s28, 1
        %s305 = scalar_lea.sflag [#allocation6], %s304
        %s306 = sand.u32 %s78, 1
        %s307 = smul.addr %s306, 32
        %s308 = scalar_lea.vmem [#allocation5], %s307
        %p309 = pneg %p91
        %p310 = pneg %p88
        %s311 = sand.u32 %s28, 1
        %s312 = scalar_lea.sflag [#allocation6], %s311
        %s313 = sand.u32 %s106, 1
        %s314 = smul.addr %s313, 32
        %s315 = scalar_lea.vmem [#allocation7], %s314
        %p316 = pneg %p119
        %p317 = pneg %p116
        %p318 = pneg %p147
        %p319 = pneg %p144
        %s320 = sand.u32 %s134, 1
        %s321 = scalar_lea.sflag [#allocation4], %s320
        %s322 = sand.u32 %s134, 1
        %s323 = smul.addr %s322, 32
        %s324 = scalar_lea.vmem [#allocation8], %s323
        %p325 = pneg %p175
        %p326 = pneg %p172
        %s327 = sand.u32 %s162, 1
        %s328 = scalar_lea.sflag [#allocation10], %s327
        %s329 = sand.u32 %s162, 1
        %s330 = smul.addr %s329, 32
        %s331 = scalar_lea.vmem [#allocation9], %s330
        %s332 = smul.u32 2, %s32
        %s333 = smul.u32 2, %s32
        %s334 = smul.u32 2, %s32
        %s335 = smul.u32 2, %s32
        %s336 = smul.u32 2, %s32
        %v337 = vld [vmem:[%s274] sm:$0xf]
        %v338 = vld [vmem:[%s274 + $0x4] sm:$0xf]
        %v339 = vld [vmem:[%s274 + $0x8] sm:$0xf]
        %v340 = vld [vmem:[%s274 + $0xc] sm:$0xf]
        %v341 = vld [vmem:[%s274 + $0x10] sm:$0xf]
        %v342 = vld [vmem:[%s274 + $0x14] sm:$0xf]
        %v343 = vld [vmem:[%s274 + $0x18] sm:$0xf]
        %v344 = vld [vmem:[%s274 + $0x1c] sm:$0xf]
        %v345 = vld [vmem:[%s283] sm:$0xf]
        %v346 = vld [vmem:[%s283 + $0x4] sm:$0xf]
        %v347 = vld [vmem:[%s283 + $0x8] sm:$0xf]
        %v348 = vld [vmem:[%s283 + $0xc] sm:$0xf]
        %v349 = vld [vmem:[%s283 + $0x10] sm:$0xf]
        %v350 = vld [vmem:[%s283 + $0x14] sm:$0xf]
        %v351 = vld [vmem:[%s283 + $0x18] sm:$0xf]
        %v352 = vld [vmem:[%s283 + $0x1c] sm:$0xf]
        %v353 = vld [vmem:[%s292] sm:$0xf]
        %v354 = vld [vmem:[%s292 + $0x4] sm:$0xf]
        %v355 = vld [vmem:[%s292 + $0x8] sm:$0xf]
        %v356 = vld [vmem:[%s292 + $0xc] sm:$0xf]
        %v357 = vld [vmem:[%s292 + $0x10] sm:$0xf]
        %v358 = vld [vmem:[%s292 + $0x14] sm:$0xf]
        %v359 = vld [vmem:[%s292 + $0x18] sm:$0xf]
        %v360 = vld [vmem:[%s292 + $0x1c] sm:$0xf]
        %v361 = vmul.f32 %v337, %v345
        %v362 = vmul.f32 %v338, %v345
        %v363 = vmul.f32 %v339, %v345
        %v364 = vmul.f32 %v340, %v345
        %v365 = vmul.f32 %v341, %v349
        %v366 = vmul.f32 %v342, %v349
        %v367 = vmul.f32 %v343, %v349
        %v368 = vmul.f32 %v344, %v349
        %vm369 = vcmask 60416
        %v370 = vsel %vm369, %v361, 0.0
        %v371 = vrot.slane %v370, 4
        %v372 = vadd.f32 %v370, %v371
        %v373 = vrot.slane %v372, 2
        %v374 = vadd.f32 %v372, %v373
        %v375 = vrot.slane %v374, 1
        %v376 = vadd.f32 %v374, %v375
        %v377 = vsel %vm369, %v362, 0.0
        %v378 = vrot.slane %v377, 4
        %v379 = vadd.f32 %v377, %v378
        %v380 = vrot.slane %v379, 2
        %v381 = vadd.f32 %v379, %v380
        %v382 = vrot.slane %v381, 1
        %v383 = vadd.f32 %v381, %v382
        %v384 = vsel %vm369, %v363, 0.0
        %v385 = vrot.slane %v384, 4
        %v386 = vadd.f32 %v384, %v385
        %v387 = vrot.slane %v386, 2
        %v388 = vadd.f32 %v386, %v387
        %v389 = vrot.slane %v388, 1
        %v390 = vadd.f32 %v388, %v389
        %v391 = vsel %vm369, %v364, 0.0
        %v392 = vrot.slane %v391, 4
        %v393 = vadd.f32 %v391, %v392
        %v394 = vrot.slane %v393, 2
        %v395 = vadd.f32 %v393, %v394
        %v396 = vrot.slane %v395, 1
        %v397 = vadd.f32 %v395, %v396
        %v398 = vsel %vm369, %v365, 0.0
        %v399 = vrot.slane %v398, 4
        %v400 = vadd.f32 %v398, %v399
        %v401 = vrot.slane %v400, 2
        %v402 = vadd.f32 %v400, %v401
        %v403 = vrot.slane %v402, 1
        %v404 = vadd.f32 %v402, %v403
        %v405 = vsel %vm369, %v366, 0.0
        %v406 = vrot.slane %v405, 4
        %v407 = vadd.f32 %v405, %v406
        %v408 = vrot.slane %v407, 2
        %v409 = vadd.f32 %v407, %v408
        %v410 = vrot.slane %v409, 1
        %v411 = vadd.f32 %v409, %v410
        %v412 = vsel %vm369, %v367, 0.0
        %v413 = vrot.slane %v412, 4
        %v414 = vadd.f32 %v412, %v413
        %v415 = vrot.slane %v414, 2
        %v416 = vadd.f32 %v414, %v415
        %v417 = vrot.slane %v416, 1
        %v418 = vadd.f32 %v416, %v417
        %v419 = vsel %vm369, %v368, 0.0
        %v420 = vrot.slane %v419, 4
        %v421 = vadd.f32 %v419, %v420
        %v422 = vrot.slane %v421, 2
        %v423 = vadd.f32 %v421, %v422
        %v424 = vrot.slane %v423, 1
        %v425 = vadd.f32 %v423, %v424
        %v426 = vmul.f32 %v376, 0.45
        %v427 = vmul.f32 %v383, 0.45
        %v428 = vmul.f32 %v390, 0.45
        %v429 = vmul.f32 %v397, 0.45
        %v430 = vmul.f32 %v404, 0.45
        %v431 = vmul.f32 %v411, 0.45
        %v432 = vmul.f32 %v418, 0.45
        %v433 = vmul.f32 %v425, 0.45
        %v434 = vmul.f32 %v337, %v346
        %v435 = vmul.f32 %v338, %v346
        %v436 = vmul.f32 %v339, %v346
        %v437 = vmul.f32 %v340, %v346
        %v438 = vmul.f32 %v341, %v350
        %v439 = vmul.f32 %v342, %v350
        %v440 = vmul.f32 %v343, %v350
        %v441 = vmul.f32 %v344, %v350
        %v442 = vsel %vm369, %v434, 0.0
        %v443 = vrot.slane %v442, 4
        %v444 = vadd.f32 %v442, %v443
        %v445 = vrot.slane %v444, 2
        %v446 = vadd.f32 %v444, %v445
        %v447 = vrot.slane %v446, 1
        %v448 = vadd.f32 %v446, %v447
        %v449 = vsel %vm369, %v435, 0.0
        %v450 = vrot.slane %v449, 4
        %v451 = vadd.f32 %v449, %v450
        %v452 = vrot.slane %v451, 2
        %v453 = vadd.f32 %v451, %v452
        %v454 = vrot.slane %v453, 1
        %v455 = vadd.f32 %v453, %v454
        %v456 = vsel %vm369, %v436, 0.0
        %v457 = vrot.slane %v456, 4
        %v458 = vadd.f32 %v456, %v457
        %v459 = vrot.slane %v458, 2
        %v460 = vadd.f32 %v458, %v459
        %v461 = vrot.slane %v460, 1
        %v462 = vadd.f32 %v460, %v461
        %v463 = vsel %vm369, %v437, 0.0
        %v464 = vrot.slane %v463, 4
        %v465 = vadd.f32 %v463, %v464
        %v466 = vrot.slane %v465, 2
        %v467 = vadd.f32 %v465, %v466
        %v468 = vrot.slane %v467, 1
        %v469 = vadd.f32 %v467, %v468
        %v470 = vsel %vm369, %v438, 0.0
        %v471 = vrot.slane %v470, 4
        %v472 = vadd.f32 %v470, %v471
        %v473 = vrot.slane %v472, 2
        %v474 = vadd.f32 %v472, %v473
        %v475 = vrot.slane %v474, 1
        %v476 = vadd.f32 %v474, %v475
        %v477 = vsel %vm369, %v439, 0.0
        %v478 = vrot.slane %v477, 4
        %v479 = vadd.f32 %v477, %v478
        %v480 = vrot.slane %v479, 2
        %v481 = vadd.f32 %v479, %v480
        %v482 = vrot.slane %v481, 1
        %v483 = vadd.f32 %v481, %v482
        %v484 = vsel %vm369, %v440, 0.0
        %v485 = vrot.slane %v484, 4
        %v486 = vadd.f32 %v484, %v485
        %v487 = vrot.slane %v486, 2
        %v488 = vadd.f32 %v486, %v487
        %v489 = vrot.slane %v488, 1
        %v490 = vadd.f32 %v488, %v489
        %v491 = vsel %vm369, %v441, 0.0
        %v492 = vrot.slane %v491, 4
        %v493 = vadd.f32 %v491, %v492
        %v494 = vrot.slane %v493, 2
        %v495 = vadd.f32 %v493, %v494
        %v496 = vrot.slane %v495, 1
        %v497 = vadd.f32 %v495, %v496
        %v498 = vmul.f32 %v448, 0.45
        %v499 = vmul.f32 %v455, 0.45
        %v500 = vmul.f32 %v462, 0.45
        %v501 = vmul.f32 %v469, 0.45
        %v502 = vmul.f32 %v476, 0.45
        %v503 = vmul.f32 %v483, 0.45
        %v504 = vmul.f32 %v490, 0.45
        %v505 = vmul.f32 %v497, 0.45
        %v506 = vmul.f32 %v337, %v347
        %v507 = vmul.f32 %v338, %v347
        %v508 = vmul.f32 %v339, %v347
        %v509 = vmul.f32 %v340, %v347
        %v510 = vmul.f32 %v341, %v351
        %v511 = vmul.f32 %v342, %v351
        %v512 = vmul.f32 %v343, %v351
        %v513 = vmul.f32 %v344, %v351
        %v514 = vsel %vm369, %v506, 0.0
        %v515 = vrot.slane %v514, 4
        %v516 = vadd.f32 %v514, %v515
        %v517 = vrot.slane %v516, 2
        %v518 = vadd.f32 %v516, %v517
        %v519 = vrot.slane %v518, 1
        %v520 = vadd.f32 %v518, %v519
        %v521 = vsel %vm369, %v507, 0.0
        %v522 = vrot.slane %v521, 4
        %v523 = vadd.f32 %v521, %v522
        %v524 = vrot.slane %v523, 2
        %v525 = vadd.f32 %v523, %v524
        %v526 = vrot.slane %v525, 1
        %v527 = vadd.f32 %v525, %v526
        %v528 = vsel %vm369, %v508, 0.0
        %v529 = vrot.slane %v528, 4
        %v530 = vadd.f32 %v528, %v529
        %v531 = vrot.slane %v530, 2
        %v532 = vadd.f32 %v530, %v531
        %v533 = vrot.slane %v532, 1
        %v534 = vadd.f32 %v532, %v533
        %v535 = vsel %vm369, %v509, 0.0
        %v536 = vrot.slane %v535, 4
        %v537 = vadd.f32 %v535, %v536
        %v538 = vrot.slane %v537, 2
        %v539 = vadd.f32 %v537, %v538
        %v540 = vrot.slane %v539, 1
        %v541 = vadd.f32 %v539, %v540
        %v542 = vsel %vm369, %v510, 0.0
        %v543 = vrot.slane %v542, 4
        %v544 = vadd.f32 %v542, %v543
        %v545 = vrot.slane %v544, 2
        %v546 = vadd.f32 %v544, %v545
        %v547 = vrot.slane %v546, 1
        %v548 = vadd.f32 %v546, %v547
        %v549 = vsel %vm369, %v511, 0.0
        %v550 = vrot.slane %v549, 4
        %v551 = vadd.f32 %v549, %v550
        %v552 = vrot.slane %v551, 2
        %v553 = vadd.f32 %v551, %v552
        %v554 = vrot.slane %v553, 1
        %v555 = vadd.f32 %v553, %v554
        %v556 = vsel %vm369, %v512, 0.0
        %v557 = vrot.slane %v556, 4
        %v558 = vadd.f32 %v556, %v557
        %v559 = vrot.slane %v558, 2
        %v560 = vadd.f32 %v558, %v559
        %v561 = vrot.slane %v560, 1
        %v562 = vadd.f32 %v560, %v561
        %v563 = vsel %vm369, %v513, 0.0
        %v564 = vrot.slane %v563, 4
        %v565 = vadd.f32 %v563, %v564
        %v566 = vrot.slane %v565, 2
        %v567 = vadd.f32 %v565, %v566
        %v568 = vrot.slane %v567, 1
        %v569 = vadd.f32 %v567, %v568
        %v570 = vmul.f32 %v520, 0.45
        %v571 = vmul.f32 %v527, 0.45
        %v572 = vmul.f32 %v534, 0.45
        %v573 = vmul.f32 %v541, 0.45
        %v574 = vmul.f32 %v548, 0.45
        %v575 = vmul.f32 %v555, 0.45
        %v576 = vmul.f32 %v562, 0.45
        %v577 = vmul.f32 %v569, 0.45
        %v578 = vmul.f32 %v337, %v348
        %v579 = vmul.f32 %v338, %v348
        %v580 = vmul.f32 %v339, %v348
        %v581 = vmul.f32 %v340, %v348
        %v582 = vmul.f32 %v341, %v352
        %v583 = vmul.f32 %v342, %v352
        %v584 = vmul.f32 %v343, %v352
        %v585 = vmul.f32 %v344, %v352
        %v586 = vsel %vm369, %v578, 0.0
        %v587 = vrot.slane %v586, 4
        %v588 = vadd.f32 %v586, %v587
        %v589 = vrot.slane %v588, 2
        %v590 = vadd.f32 %v588, %v589
        %v591 = vrot.slane %v590, 1
        %v592 = vadd.f32 %v590, %v591
        %v593 = vsel %vm369, %v579, 0.0
        %v594 = vrot.slane %v593, 4
        %v595 = vadd.f32 %v593, %v594
        %v596 = vrot.slane %v595, 2
        %v597 = vadd.f32 %v595, %v596
        %v598 = vrot.slane %v597, 1
        %v599 = vadd.f32 %v597, %v598
        %v600 = vsel %vm369, %v580, 0.0
        %v601 = vrot.slane %v600, 4
        %v602 = vadd.f32 %v600, %v601
        %v603 = vrot.slane %v602, 2
        %v604 = vadd.f32 %v602, %v603
        %v605 = vrot.slane %v604, 1
        %v606 = vadd.f32 %v604, %v605
        %v607 = vsel %vm369, %v581, 0.0
        %v608 = vrot.slane %v607, 4
        %v609 = vadd.f32 %v607, %v608
        %v610 = vrot.slane %v609, 2
        %v611 = vadd.f32 %v609, %v610
        %v612 = vrot.slane %v611, 1
        %v613 = vadd.f32 %v611, %v612
        %v614 = vsel %vm369, %v582, 0.0
        %v615 = vrot.slane %v614, 4
        %v616 = vadd.f32 %v614, %v615
        %v617 = vrot.slane %v616, 2
        %v618 = vadd.f32 %v616, %v617
        %v619 = vrot.slane %v618, 1
        %v620 = vadd.f32 %v618, %v619
        %v621 = vsel %vm369, %v583, 0.0
        %v622 = vrot.slane %v621, 4
        %v623 = vadd.f32 %v621, %v622
        %v624 = vrot.slane %v623, 2
        %v625 = vadd.f32 %v623, %v624
        %v626 = vrot.slane %v625, 1
        %v627 = vadd.f32 %v625, %v626
        %v628 = vsel %vm369, %v584, 0.0
        %v629 = vrot.slane %v628, 4
        %v630 = vadd.f32 %v628, %v629
        %v631 = vrot.slane %v630, 2
        %v632 = vadd.f32 %v630, %v631
        %v633 = vrot.slane %v632, 1
        %v634 = vadd.f32 %v632, %v633
        %v635 = vsel %vm369, %v585, 0.0
        %v636 = vrot.slane %v635, 4
        %v637 = vadd.f32 %v635, %v636
        %v638 = vrot.slane %v637, 2
        %v639 = vadd.f32 %v637, %v638
        %v640 = vrot.slane %v639, 1
        %v641 = vadd.f32 %v639, %v640
        %v642 = vmul.f32 %v592, 0.45
        %v643 = vmul.f32 %v599, 0.45
        %v644 = vmul.f32 %v606, 0.45
        %v645 = vmul.f32 %v613, 0.45
        %v646 = vmul.f32 %v620, 0.45
        %v647 = vmul.f32 %v627, 0.45
        %v648 = vmul.f32 %v634, 0.45
        %v649 = vmul.f32 %v641, 0.45
        %vm650 = vcmask 1040384
        %v651 = vsel %vm650, %v426, %v498
        %v652 = vsel %vm650, %v427, %v499
        %v653 = vsel %vm650, %v428, %v500
        %v654 = vsel %vm650, %v429, %v501
        %v655 = vsel %vm650, %v430, %v502
        %v656 = vsel %vm650, %v431, %v503
        %v657 = vsel %vm650, %v432, %v504
        %v658 = vsel %vm650, %v433, %v505
        %vm659 = vcmask 1041408
        %v660 = vsel %vm659, %v651, %v570
        %v661 = vsel %vm659, %v652, %v571
        %v662 = vsel %vm659, %v653, %v572
        %v663 = vsel %vm659, %v654, %v573
        %v664 = vsel %vm659, %v655, %v574
        %v665 = vsel %vm659, %v656, %v575
        %v666 = vsel %vm659, %v657, %v576
        %v667 = vsel %vm659, %v658, %v577
        %vm668 = vcmask 1042432
        %v669 = vsel %vm668, %v660, %v642
        %v670 = vsel %vm668, %v661, %v643
        %v671 = vsel %vm668, %v662, %v644
        %v672 = vsel %vm668, %v663, %v645
        %v673 = vsel %vm668, %v664, %v646
        %v674 = vsel %vm668, %v665, %v647
        %v675 = vsel %vm668, %v666, %v648
        %v676 = vsel %vm668, %v667, %v649
        %v677 = vsel %vm369, %v669, -inf
        %v678 = vrot.slane %v677, 4
        %v679 = vmax.f32 %v677, %v678
        %v680 = vrot.slane %v679, 2
        %v681 = vmax.f32 %v679, %v680
        %v682 = vrot.slane %v681, 1
        %v683 = vmax.f32 %v681, %v682
        %v684 = vsel %vm369, %v670, -inf
        %v685 = vrot.slane %v684, 4
        %v686 = vmax.f32 %v684, %v685
        %v687 = vrot.slane %v686, 2
        %v688 = vmax.f32 %v686, %v687
        %v689 = vrot.slane %v688, 1
        %v690 = vmax.f32 %v688, %v689
        %v691 = vsel %vm369, %v671, -inf
        %v692 = vrot.slane %v691, 4
        %v693 = vmax.f32 %v691, %v692
        %v694 = vrot.slane %v693, 2
        %v695 = vmax.f32 %v693, %v694
        %v696 = vrot.slane %v695, 1
        %v697 = vmax.f32 %v695, %v696
        %v698 = vsel %vm369, %v672, -inf
        %v699 = vrot.slane %v698, 4
        %v700 = vmax.f32 %v698, %v699
        %v701 = vrot.slane %v700, 2
        %v702 = vmax.f32 %v700, %v701
        %v703 = vrot.slane %v702, 1
        %v704 = vmax.f32 %v702, %v703
        %v705 = vsel %vm369, %v673, -inf
        %v706 = vrot.slane %v705, 4
        %v707 = vmax.f32 %v705, %v706
        %v708 = vrot.slane %v707, 2
        %v709 = vmax.f32 %v707, %v708
        %v710 = vrot.slane %v709, 1
        %v711 = vmax.f32 %v709, %v710
        %v712 = vsel %vm369, %v674, -inf
        %v713 = vrot.slane %v712, 4
        %v714 = vmax.f32 %v712, %v713
        %v715 = vrot.slane %v714, 2
        %v716 = vmax.f32 %v714, %v715
        %v717 = vrot.slane %v716, 1
        %v718 = vmax.f32 %v716, %v717
        %v719 = vsel %vm369, %v675, -inf
        %v720 = vrot.slane %v719, 4
        %v721 = vmax.f32 %v719, %v720
        %v722 = vrot.slane %v721, 2
        %v723 = vmax.f32 %v721, %v722
        %v724 = vrot.slane %v723, 1
        %v725 = vmax.f32 %v723, %v724
        %v726 = vsel %vm369, %v676, -inf
        %v727 = vrot.slane %v726, 4
        %v728 = vmax.f32 %v726, %v727
        %v729 = vrot.slane %v728, 2
        %v730 = vmax.f32 %v728, %v729
        %v731 = vrot.slane %v730, 1
        %v732 = vmax.f32 %v730, %v731
        %v733 = vsub.f32 %v669, %v683
        %v734 = vsub.f32 %v670, %v690
        %v735 = vsub.f32 %v671, %v697
        %v736 = vsub.f32 %v672, %v704
        %v737 = vsub.f32 %v673, %v711
        %v738 = vsub.f32 %v674, %v718
        %v739 = vsub.f32 %v675, %v725
        %v740 = vsub.f32 %v676, %v732
        %v741 = vmul.f32 %v733, 1.442695
        %v742 = vpow.pop %v741
        %v743 = vmul.f32 %v734, 1.442695
        %v744 = vpow.pop %v743
        %v745 = vmul.f32 %v735, 1.442695
        %v746 = vpow.pop %v745
        %v747 = vmul.f32 %v736, 1.442695
        %v748 = vpow.pop %v747
        %v749 = vmul.f32 %v737, 1.442695
        %v750 = vpow.pop %v749
        %v751 = vmul.f32 %v738, 1.442695
        %v752 = vpow.pop %v751
        %v753 = vmul.f32 %v739, 1.442695
        %v754 = vpow.pop %v753
        %v755 = vmul.f32 %v740, 1.442695
        %v756 = vpow.pop %v755
        %v757 = vsel %vm369, %v742, 0.0
        %v758 = vrot.slane %v757, 4
        %v759 = vadd.f32 %v757, %v758
        %v760 = vrot.slane %v759, 2
        %v761 = vadd.f32 %v759, %v760
        %v762 = vrot.slane %v761, 1
        %v763 = vadd.f32 %v761, %v762
        %v764 = vsel %vm369, %v744, 0.0
        %v765 = vrot.slane %v764, 4
        %v766 = vadd.f32 %v764, %v765
        %v767 = vrot.slane %v766, 2
        %v768 = vadd.f32 %v766, %v767
        %v769 = vrot.slane %v768, 1
        %v770 = vadd.f32 %v768, %v769
        %v771 = vsel %vm369, %v746, 0.0
        %v772 = vrot.slane %v771, 4
        %v773 = vadd.f32 %v771, %v772
        %v774 = vrot.slane %v773, 2
        %v775 = vadd.f32 %v773, %v774
        %v776 = vrot.slane %v775, 1
        %v777 = vadd.f32 %v775, %v776
        %v778 = vsel %vm369, %v748, 0.0
        %v779 = vrot.slane %v778, 4
        %v780 = vadd.f32 %v778, %v779
        %v781 = vrot.slane %v780, 2
        %v782 = vadd.f32 %v780, %v781
        %v783 = vrot.slane %v782, 1
        %v784 = vadd.f32 %v782, %v783
        %v785 = vsel %vm369, %v750, 0.0
        %v786 = vrot.slane %v785, 4
        %v787 = vadd.f32 %v785, %v786
        %v788 = vrot.slane %v787, 2
        %v789 = vadd.f32 %v787, %v788
        %v790 = vrot.slane %v789, 1
        %v791 = vadd.f32 %v789, %v790
        %v792 = vsel %vm369, %v752, 0.0
        %v793 = vrot.slane %v792, 4
        %v794 = vadd.f32 %v792, %v793
        %v795 = vrot.slane %v794, 2
        %v796 = vadd.f32 %v794, %v795
        %v797 = vrot.slane %v796, 1
        %v798 = vadd.f32 %v796, %v797
        %v799 = vsel %vm369, %v754, 0.0
        %v800 = vrot.slane %v799, 4
        %v801 = vadd.f32 %v799, %v800
        %v802 = vrot.slane %v801, 2
        %v803 = vadd.f32 %v801, %v802
        %v804 = vrot.slane %v803, 1
        %v805 = vadd.f32 %v803, %v804
        %v806 = vsel %vm369, %v756, 0.0
        %v807 = vrot.slane %v806, 4
        %v808 = vadd.f32 %v806, %v807
        %v809 = vrot.slane %v808, 2
        %v810 = vadd.f32 %v808, %v809
        %v811 = vrot.slane %v810, 1
        %v812 = vadd.f32 %v810, %v811
        %v813 = vrcp.pop %v763
        %v814 = vmul.f32 %v742, %v813
        %v815 = vrcp.pop %v770
        %v816 = vmul.f32 %v744, %v815
        %v817 = vrcp.pop %v777
        %v818 = vmul.f32 %v746, %v817
        %v819 = vrcp.pop %v784
        %v820 = vmul.f32 %v748, %v819
        %v821 = vrcp.pop %v791
        %v822 = vmul.f32 %v750, %v821
        %v823 = vrcp.pop %v798
        %v824 = vmul.f32 %v752, %v823
        %v825 = vrcp.pop %v805
        %v826 = vmul.f32 %v754, %v825
        %v827 = vrcp.pop %v812
        %v828 = vmul.f32 %v756, %v827
        %v829 = vlaneseq
        %v830 = vshrl.u32 %v829, 7
        %v831 = vsub.s32 0, %v830
        %v832 = vrot.slane %v814, %v831
        %v833 = vlaneseq
        %v834 = vshrl.u32 %v833, 7
        %v835 = vsub.s32 0, %v834
        %v836 = vrot.slane %v816, %v835
        %v837 = vlaneseq
        %v838 = vshrl.u32 %v837, 7
        %v839 = vsub.s32 0, %v838
        %v840 = vrot.slane %v818, %v839
        %v841 = vlaneseq
        %v842 = vshrl.u32 %v841, 7
        %v843 = vsub.s32 0, %v842
        %v844 = vrot.slane %v820, %v843
        %v845 = vlaneseq
        %v846 = vshrl.u32 %v845, 7
        %v847 = vsub.s32 0, %v846
        %v848 = vrot.slane %v822, %v847
        %v849 = vlaneseq
        %v850 = vshrl.u32 %v849, 7
        %v851 = vsub.s32 0, %v850
        %v852 = vrot.slane %v824, %v851
        %v853 = vlaneseq
        %v854 = vshrl.u32 %v853, 7
        %v855 = vsub.s32 0, %v854
        %v856 = vrot.slane %v826, %v855
        %v857 = vlaneseq
        %v858 = vshrl.u32 %v857, 7
        %v859 = vsub.s32 0, %v858
        %v860 = vrot.slane %v828, %v859
        %v861 = vmul.f32 %v832, %v353
        %v862 = vmul.f32 %v836, %v353
        %v863 = vmul.f32 %v840, %v353
        %v864 = vmul.f32 %v844, %v353
        %v865 = vmul.f32 %v848, %v357
        %v866 = vmul.f32 %v852, %v357
        %v867 = vmul.f32 %v856, %v357
        %v868 = vmul.f32 %v860, %v357
        %v869 = vlaneseq
        %v870 = vshrl.u32 %v869, 7
        %v871 = vsub.s32 1, %v870
        %v872 = vrot.slane %v814, %v871
        %v873 = vlaneseq
        %v874 = vshrl.u32 %v873, 7
        %v875 = vsub.s32 1, %v874
        %v876 = vrot.slane %v816, %v875
        %v877 = vlaneseq
        %v878 = vshrl.u32 %v877, 7
        %v879 = vsub.s32 1, %v878
        %v880 = vrot.slane %v818, %v879
        %v881 = vlaneseq
        %v882 = vshrl.u32 %v881, 7
        %v883 = vsub.s32 1, %v882
        %v884 = vrot.slane %v820, %v883
        %v885 = vlaneseq
        %v886 = vshrl.u32 %v885, 7
        %v887 = vsub.s32 1, %v886
        %v888 = vrot.slane %v822, %v887
        %v889 = vlaneseq
        %v890 = vshrl.u32 %v889, 7
        %v891 = vsub.s32 1, %v890
        %v892 = vrot.slane %v824, %v891
        %v893 = vlaneseq
        %v894 = vshrl.u32 %v893, 7
        %v895 = vsub.s32 1, %v894
        %v896 = vrot.slane %v826, %v895
        %v897 = vlaneseq
        %v898 = vshrl.u32 %v897, 7
        %v899 = vsub.s32 1, %v898
        %v900 = vrot.slane %v828, %v899
        %v901 = vmul.f32 %v872, %v354
        %v902 = vmul.f32 %v876, %v354
        %v903 = vmul.f32 %v880, %v354
        %v904 = vmul.f32 %v884, %v354
        %v905 = vmul.f32 %v888, %v358
        %v906 = vmul.f32 %v892, %v358
        %v907 = vmul.f32 %v896, %v358
        %v908 = vmul.f32 %v900, %v358
        %v909 = vadd.f32 %v861, %v901
        %v910 = vadd.f32 %v862, %v902
        %v911 = vadd.f32 %v863, %v903
        %v912 = vadd.f32 %v864, %v904
        %v913 = vadd.f32 %v865, %v905
        %v914 = vadd.f32 %v866, %v906
        %v915 = vadd.f32 %v867, %v907
        %v916 = vadd.f32 %v868, %v908
        %v917 = vlaneseq
        %v918 = vshrl.u32 %v917, 7
        %v919 = vsub.s32 2, %v918
        %v920 = vrot.slane %v814, %v919
        %v921 = vlaneseq
        %v922 = vshrl.u32 %v921, 7
        %v923 = vsub.s32 2, %v922
        %v924 = vrot.slane %v816, %v923
        %v925 = vlaneseq
        %v926 = vshrl.u32 %v925, 7
        %v927 = vsub.s32 2, %v926
        %v928 = vrot.slane %v818, %v927
        %v929 = vlaneseq
        %v930 = vshrl.u32 %v929, 7
        %v931 = vsub.s32 2, %v930
        %v932 = vrot.slane %v820, %v931
        %v933 = vlaneseq
        %v934 = vshrl.u32 %v933, 7
        %v935 = vsub.s32 2, %v934
        %v936 = vrot.slane %v822, %v935
        %v937 = vlaneseq
        %v938 = vshrl.u32 %v937, 7
        %v939 = vsub.s32 2, %v938
        %v940 = vrot.slane %v824, %v939
        %v941 = vlaneseq
        %v942 = vshrl.u32 %v941, 7
        %v943 = vsub.s32 2, %v942
        %v944 = vrot.slane %v826, %v943
        %v945 = vlaneseq
        %v946 = vshrl.u32 %v945, 7
        %v947 = vsub.s32 2, %v946
        %v948 = vrot.slane %v828, %v947
        %v949 = vmul.f32 %v920, %v355
        %v950 = vmul.f32 %v924, %v355
        %v951 = vmul.f32 %v928, %v355
        %v952 = vmul.f32 %v932, %v355
        %v953 = vmul.f32 %v936, %v359
        %v954 = vmul.f32 %v940, %v359
        %v955 = vmul.f32 %v944, %v359
        %v956 = vmul.f32 %v948, %v359
        %v957 = vadd.f32 %v909, %v949
        %v958 = vadd.f32 %v910, %v950
        %v959 = vadd.f32 %v911, %v951
        %v960 = vadd.f32 %v912, %v952
        %v961 = vadd.f32 %v913, %v953
        %v962 = vadd.f32 %v914, %v954
        %v963 = vadd.f32 %v915, %v955
        %v964 = vadd.f32 %v916, %v956
        %v965 = vlaneseq
        %v966 = vshrl.u32 %v965, 7
        %v967 = vsub.s32 3, %v966
        %v968 = vrot.slane %v814, %v967
        %v969 = vlaneseq
        %v970 = vshrl.u32 %v969, 7
        %v971 = vsub.s32 3, %v970
        %v972 = vrot.slane %v816, %v971
        %v973 = vlaneseq
        %v974 = vshrl.u32 %v973, 7
        %v975 = vsub.s32 3, %v974
        %v976 = vrot.slane %v818, %v975
        %v977 = vlaneseq
        %v978 = vshrl.u32 %v977, 7
        %v979 = vsub.s32 3, %v978
        %v980 = vrot.slane %v820, %v979
        %v981 = vlaneseq
        %v982 = vshrl.u32 %v981, 7
        %v983 = vsub.s32 3, %v982
        %v984 = vrot.slane %v822, %v983
        %v985 = vlaneseq
        %v986 = vshrl.u32 %v985, 7
        %v987 = vsub.s32 3, %v986
        %v988 = vrot.slane %v824, %v987
        %v989 = vlaneseq
        %v990 = vshrl.u32 %v989, 7
        %v991 = vsub.s32 3, %v990
        %v992 = vrot.slane %v826, %v991
        %v993 = vlaneseq
        %v994 = vshrl.u32 %v993, 7
        %v995 = vsub.s32 3, %v994
        %v996 = vrot.slane %v828, %v995
        %v997 = vmul.f32 %v968, %v356
        %v998 = vmul.f32 %v972, %v356
        %v999 = vmul.f32 %v976, %v356
        %v1000 = vmul.f32 %v980, %v356
        %v1001 = vmul.f32 %v984, %v360
        %v1002 = vmul.f32 %v988, %v360
        %v1003 = vmul.f32 %v992, %v360
        %v1004 = vmul.f32 %v996, %v360
        %v1005 = vadd.f32 %v957, %v997
        %v1006 = vadd.f32 %v958, %v998
        %v1007 = vadd.f32 %v959, %v999
        %v1008 = vadd.f32 %v960, %v1000
        %v1009 = vadd.f32 %v961, %v1001
        %v1010 = vadd.f32 %v962, %v1002
        %v1011 = vadd.f32 %v963, %v1003
        %v1012 = vadd.f32 %v964, %v1004
        %1013 = vst.msk [vmem:[%s324] sm:$0xf] %vm369, %v1005
        %1014 = vst.msk [vmem:[%s324 + $0x4] sm:$0xf] %vm369, %v1006
        %1015 = vst.msk [vmem:[%s324 + $0x8] sm:$0xf] %vm369, %v1007
        %1016 = vst.msk [vmem:[%s324 + $0xc] sm:$0xf] %vm369, %v1008
        %1017 = vst.msk [vmem:[%s324 + $0x10] sm:$0xf] %vm369, %v1009
        %1018 = vst.msk [vmem:[%s324 + $0x14] sm:$0xf] %vm369, %v1010
        %1019 = vst.msk [vmem:[%s324 + $0x18] sm:$0xf] %vm369, %v1011
        %1020 = vst.msk [vmem:[%s324 + $0x1c] sm:$0xf] %vm369, %v1012
        %1021 = vst.msk [vmem:[%s331] sm:$0xf] %vm369, %v814
        %1022 = vst.msk [vmem:[%s331 + $0x4] sm:$0xf] %vm369, %v816
        %1023 = vst.msk [vmem:[%s331 + $0x8] sm:$0xf] %vm369, %v818
        %1024 = vst.msk [vmem:[%s331 + $0xc] sm:$0xf] %vm369, %v820
        %1025 = vst.msk [vmem:[%s331 + $0x10] sm:$0xf] %vm369, %v822
        %1026 = vst.msk [vmem:[%s331 + $0x14] sm:$0xf] %vm369, %v824
        %1027 = vst.msk [vmem:[%s331 + $0x18] sm:$0xf] %vm369, %v826
        %1028 = vst.msk [vmem:[%s331 + $0x1c] sm:$0xf] %vm369, %v828
        %s1029 = sand.u32 %s134, 1
        %s1030 = scalar_lea.sflag [#allocation4], %s1029
        %s1031 = sand.u32 %s134, 1
        %s1032 = smul.addr %s1031, 32
        %s1033 = scalar_lea.vmem [#allocation8], %s1032
        %s1034 = sand.u32 %s162, 1
        %s1035 = scalar_lea.sflag [#allocation10], %s1034
        %s1036 = sand.u32 %s162, 1
        %s1037 = smul.addr %s1036, 32
        %s1038 = scalar_lea.vmem [#allocation9], %s1037
        // Predicated region
        $region45: #{tpu_custom_call.1} parent=31 // pred_check
          %p1039 = pneg %p144
        $region46: #{tpu_custom_call.1} parent=31 // pred_check_branch
          %1041 = sbr.rel (%p1039) target = $region48
        $region47: #{tpu_custom_call.1} parent=31 // pred_region
          %s1042 = smul.u32 2, %s32
          %s1044 = ssub.s32 512, 512
          %1045 = vsyncadd %s1030, %s1044
          %s1046 = smul.addr %s1042, 4
          %s1047 = sadd.s32 %s33, %s1046
          %s1048 = smul.addr %s1047, 64
          %s1049 = scalar_lea.hbm %s3, %s1048
          %s1050 = sshll.u32 %s1033, 4
          %s1051 = int_to_ptr.vmem [resolvable:$true] %s1050
          %1056 = dma.vmem_to_hbm [thread:$0]  %s1051, 512, %s1049, %s1030, 64, 64, 4
        $region48: #{tpu_custom_call.1} parent=31 // pred_fallthru
          _
        // Predicated region
        $region49: #{tpu_custom_call.1} parent=31 // pred_check
          %p1057 = pneg %p172
        $region50: #{tpu_custom_call.1} parent=31 // pred_check_branch
          %1059 = sbr.rel (%p1057) target = $region52
        $region51: #{tpu_custom_call.1} parent=31 // pred_region
          %s1060 = smul.u32 2, %s32
          %s1062 = ssub.s32 512, 512
          %1063 = vsyncadd %s1035, %s1062
          %s1064 = smul.addr %s1060, 4
          %s1065 = sadd.s32 %s33, %s1064
          %s1066 = smul.addr %s1065, 64
          %s1067 = scalar_lea.hbm %s4, %s1066
          %s1068 = sshll.u32 %s1038, 4
          %s1069 = int_to_ptr.vmem [resolvable:$true] %s1068
          %1074 = dma.vmem_to_hbm [thread:$0]  %s1069, 512, %s1067, %s1035, 64, 64, 4
        $region52: #{tpu_custom_call.1} parent=31 // pred_fallthru
          _
      $region32: #{tpu_custom_call.1} parent=5 // pred_fallthru
        _
      %p1075 = scmp.le.s32.totalorder 2, %s23
      // Predicated region
      $region53: #{tpu_custom_call.1} parent=5 // pred_check
        %p1076 = pneg %p1075
      $region54: #{tpu_custom_call.1} parent=5 // pred_check_branch
        %1078 = sbr.rel (%p1076) target = $region56
      $region55: #{tpu_custom_call.1} parent=5 // pred_region
        %s1079 = ssub.s32 %s23, 2
        // Predicated region
        $region57: #{tpu_custom_call.1} parent=55 // pred_check
          %p1080 = pneg %p150
        $region58: #{tpu_custom_call.1} parent=55 // pred_check_branch
          %1082 = sbr.rel (%p1080) target = $region60
        $region59: #{tpu_custom_call.1} parent=55 // pred_region
          %s1083 = sand.u32 %s135, 1
          %s1084 = scalar_lea.sflag [#allocation4], %s1083
          %s1085 = sand.u32 %s135, 1
          %s1086 = smul.addr %s1085, 32
          %s1087 = scalar_lea.vmem [#allocation8], %s1086
          %1088 = dma.done %s1084, 512
        $region60: #{tpu_custom_call.1} parent=55 // pred_fallthru
          _
        // Predicated region
        $region61: #{tpu_custom_call.1} parent=55 // pred_check
          %p1089 = pneg %p178
        $region62: #{tpu_custom_call.1} parent=55 // pred_check_branch
          %1091 = sbr.rel (%p1089) target = $region64
        $region63: #{tpu_custom_call.1} parent=55 // pred_region
          %s1092 = sand.u32 %s163, 1
          %s1093 = scalar_lea.sflag [#allocation10], %s1092
          %s1094 = sand.u32 %s163, 1
          %s1095 = smul.addr %s1094, 32
          %s1096 = scalar_lea.vmem [#allocation9], %s1095
          %1097 = dma.done %s1093, 512
        $region64: #{tpu_custom_call.1} parent=55 // pred_fallthru
          _
      $region56: #{tpu_custom_call.1} parent=5 // pred_fallthru
        _
    $region6: #{tpu_custom_call.1} parent=1 // loop_footer
      %s27 = sadd.s32 1, %s23
    $region7: #{tpu_custom_call.1} parent=1 // loop_footer_branch
      %22 = sbr.rel target = $region3
    $region8: #{tpu_custom_call.1} parent=1 // loop_exit
      _
    %1098 = vsyncpa [#allocation3], 1
    %s1099 = scalar_lea.sflag [#allocation3], 1
    %1100 = vsyncpa %s1099, 1
    %1101 = vsyncpa [#allocation6], 1
    %s1102 = scalar_lea.sflag [#allocation6], 1
    %1103 = vsyncpa %s1102, 1
    %1104 = vsyncpa [#allocation4], 1
    %s1105 = scalar_lea.sflag [#allocation4], 1
    %1106 = vsyncpa %s1105, 1
    %1107 = vsyncpa [#allocation10], 1
    %s1108 = scalar_lea.sflag [#allocation10], 1
    %1109 = vsyncpa %s1108, 1

</llo_original>
